<compile_context>
chip_gen: v7x
topology: tpu7x:2x2x1
jax: 0.10.0
libtpu: 0.0.40
codegen_flags: <defaults>
</compile_context>

<pallas_src>
import functools

import jax
import jax.numpy as jnp
from jax import lax
from jax.experimental import pallas as pl
from jax.experimental.pallas import tpu as pltpu


# ----------------------------------------------------------------------------
# Pallas kernel: fused block-diagonal conv (all splits) + bias + ReLU,
# spatial axis on lanes.
# ----------------------------------------------------------------------------
def _dyn_spl_conv_kernel(x_ref, w_ref, b_ref, o_ref, xpad_ref, *,
                         H, W, k_max, halo):
    """One batch element per grid step.

    x_ref:    (1, C, H*W)            flattened activation (compute dtype)
    w_ref:    (k_max*k_max, C_out, C) BN-folded, block-diagonal tap weights
    b_ref:    (C_out, 1)             BN-folded bias (f32)
    o_ref:    (1, C_out, H*W)
    xpad_ref: (C, H*W + 2*halo)      VMEM scratch with zero halo
    """
    HW = H * W
    pad = k_max // 2
    cin = x_ref.shape[1]
    cout = o_ref.shape[1]

    # Stage the flattened image into a zero-haloed VMEM buffer so every tap
    # (dh, dw) becomes a static lane-offset slice (no HBM pre-padding).
    zeros_halo = jnp.zeros((cin, halo), xpad_ref.dtype)
    xpad_ref[:, 0:halo] = zeros_halo
    xpad_ref[:, halo + HW:halo + HW + halo] = zeros_halo
    xpad_ref[:, halo:halo + HW] = x_ref[0]

    # Width coordinate of each lane; masks taps whose kw-shift crosses a row
    # boundary.  (H out-of-range reads land in the zero halo automatically.)
    col = lax.broadcasted_iota(jnp.int32, (1, HW), 1) % W
    masks = {
        dw: jnp.logical_and(col + dw >= 0, col + dw < W)
        for dw in range(-pad, pad + 1) if dw != 0
    }

    # f32 accumulator initialized with the BN-folded bias (broadcast over
    # lanes, hoisted out of the tap loop).
    acc = jnp.broadcast_to(b_ref[...], (cout, HW)).astype(jnp.float32)

    # Convolution as a contraction over (kh, kw, cin): each tap is a
    # lane-dense (C_out, C) x (C, H*W) MXU matmul accumulated in f32.
    for kh in range(k_max):
        for kw in range(k_max):
            dh, dw = kh - pad, kw - pad
            start = halo + dh * W + dw
            blk = xpad_ref[:, start:start + HW]              # (C, HW)
            if dw != 0:
                blk = jnp.where(masks[dw], blk, jnp.zeros_like(blk))
            acc = acc + lax.dot_general(
                w_ref[kh * k_max + kw], blk,
                (((1,), (0,)), ((), ())),
                preferred_element_type=jnp.float32)

    o_ref[0] = jnp.maximum(acc, 0.0).astype(o_ref.dtype)


# ----------------------------------------------------------------------------
# Module: parameter construction + forward
# ----------------------------------------------------------------------------
def _channel_splits(channels, num_splits):
    base, rem = channels // num_splits, channels % num_splits
    return [base + (1 if i < rem else 0) for i in range(num_splits)]


def init_dynamic_spl_conv2d(key, in_channels, out_channels, num_splits):
    """Deterministic parameter init matching the module's shapes."""
    kernel_sizes = [1 + 2 * i for i in range(num_splits)]
    in_splits = _channel_splits(in_channels, num_splits)
    out_splits = _channel_splits(out_channels, num_splits)
    params = []
    for i in range(num_splits):
        k = kernel_sizes[i]
        cin, cout = in_splits[i], out_splits[i]
        key, kw_, kb_, kg_, kbe_, km_, kv_ = jax.random.split(key, 7)
        fan_in = cin * k * k
        bound = 1.0 / jnp.sqrt(jnp.float32(fan_in))
        w = jax.random.uniform(kw_, (cout, cin, k, k), jnp.float32, -bound, bound)
        b = jax.random.uniform(kb_, (cout,), jnp.float32, -bound, bound)
        gamma = 1.0 + 0.1 * jax.random.normal(kg_, (cout,), jnp.float32)
        beta = 0.1 * jax.random.normal(kbe_, (cout,), jnp.float32)
        running_mean = 0.1 * jax.random.normal(km_, (cout,), jnp.float32)
        running_var = jnp.abs(jax.random.normal(kv_, (cout,), jnp.float32)) + 0.5
        params.append(dict(kernel_size=k, weight=w, bias=b, gamma=gamma,
                           beta=beta, mean=running_mean, var=running_var))
    return params


def dynamic_spl_conv2d_forward(x_nchw, params, num_splits, eps=1e-5,
                               compute_dtype=jnp.bfloat16):
    """Pallas forward. x_nchw: (N, C, H, W) float32 -> (N, C_out, H, W)."""
    N, C, H, W = x_nchw.shape
    HW = H * W
    in_splits = _channel_splits(C, num_splits)
    out_splits = [int(p["weight"].shape[0]) for p in params]
    C_out = sum(out_splits)
    k_max = max(int(p["kernel_size"]) for p in params)
    pad = k_max // 2

    # --- host-side prep (tiny: O(C_out * C * k_max^2)) -----------------------
    # Merge all splits into one block-diagonal, BN-folded weight tensor
    # (k_max*k_max, C_out, C): smaller kernels are centered in the k_max
    # window; channels outside a split's block stay zero, so the single fused
    # conv reproduces the per-split convs + channel concat exactly.
    w_all = jnp.zeros((C_out, k_max, k_max, C), jnp.float32)
    b_all = jnp.zeros((C_out,), jnp.float32)
    in_off = out_off = 0
    for i, p in enumerate(params):
        k = int(p["kernel_size"])
        cin_i, cout_i = in_splits[i], out_splits[i]
        scale = p["gamma"] / jnp.sqrt(p["var"] + eps)            # (cout_i,)
        w_f = p["weight"] * scale[:, None, None, None]           # OIHW, BN-folded
        b_f = (p["bias"] - p["mean"]) * scale + p["beta"]
        w_t = jnp.transpose(w_f, (0, 2, 3, 1))                   # (cout_i, k, k, cin_i)
        ph = (k_max - k) // 2                                    # center smaller kernels
        w_all = w_all.at[out_off:out_off + cout_i,
                         ph:ph + k, ph:ph + k,
                         in_off:in_off + cin_i].set(w_t)
        b_all = b_all.at[out_off:out_off + cout_i].set(b_f)
        in_off += cin_i
        out_off += cout_i
    w_taps = jnp.transpose(w_all, (1, 2, 0, 3)).reshape(k_max * k_max, C_out, C)
    w_taps = w_taps.astype(compute_dtype)
    b_col = b_all.reshape(C_out, 1)                              # f32 bias

    # NCHW -> (N, C, H*W): a free reshape (contiguous) — no transposes needed
    # because the kernel keeps the flattened spatial axis on the 128 lanes.
    x_flat = x_nchw.reshape(N, C, HW).astype(compute_dtype)

    halo = ((pad * W + pad + 127) // 128) * 128                  # lane-aligned halo

    kernel = functools.partial(_dyn_spl_conv_kernel,
                               H=H, W=W, k_max=k_max, halo=halo)
    y = pl.pallas_call(
        kernel,
        out_shape=jax.ShapeDtypeStruct((N, C_out, HW), x_nchw.dtype),
        grid=(N,),
        in_specs=[
            pl.BlockSpec((1, C, HW), lambda n: (n, 0, 0)),
            pl.BlockSpec((k_max * k_max, C_out, C), lambda n: (0, 0, 0)),
            pl.BlockSpec((C_out, 1), lambda n: (0, 0)),
        ],
        out_specs=pl.BlockSpec((1, C_out, HW), lambda n: (n, 0, 0)),
        scratch_shapes=[pltpu.VMEM((C, HW + 2 * halo), compute_dtype)],
        compiler_params=pltpu.CompilerParams(
            dimension_semantics=("parallel",),           # v7x: 2 TCs share batch
            vmem_limit_bytes=32 * 1024 * 1024),
    )(x_flat, w_taps, b_col)

    return y.reshape(N, C_out, H, W)


# ----------------------------------------------------------------------------
# Pure-JAX reference (eval-mode BN) for correctness check
# ----------------------------------------------------------------------------
def reference_forward(x_nchw, params, num_splits, eps=1e-5):
    channel = x_nchw.shape[1]
    split_sizes = _channel_splits(channel, num_splits)
    offsets = [0]
    for s in split_sizes:
        offsets.append(offsets[-1] + s)
    outs = []
    for i, p in enumerate(params):
        xi = x_nchw[:, offsets[i]:offsets[i + 1], :, :]
        k = p["kernel_size"]
        pad = k // 2
        y = lax.conv_general_dilated(
            xi, p["weight"], window_strides=(1, 1),
            padding=[(pad, pad), (pad, pad)],
            dimension_numbers=("NCHW", "OIHW", "NCHW"))
        y = y + p["bias"][None, :, None, None]
        y = (y - p["mean"][None, :, None, None]) / jnp.sqrt(
            p["var"][None, :, None, None] + eps)
        y = y * p["gamma"][None, :, None, None] + p["beta"][None, :, None, None]
        outs.append(jnp.maximum(y, 0.0))
    return jnp.concatenate(outs, axis=1)


if __name__ == "__main__":
    key = jax.random.PRNGKey(0)
    k_x, k_p = jax.random.split(key)

    # Small shapes consistent with the module.
    batch, in_channels, out_channels, num_splits = 2, 4, 6, 2
    H = W = 16
    x = jax.random.normal(k_x, (batch, in_channels, H, W), jnp.float32)
    params = init_dynamic_spl_conv2d(k_p, in_channels, out_channels, num_splits)

    ref = reference_forward(x, params, num_splits)

    # f32 compute path: tight numerical check against the XLA reference.
    out_f32 = dynamic_spl_conv2d_forward(x, params, num_splits,
                                         compute_dtype=jnp.float32)
    out_f32 = jax.block_until_ready(out_f32)
    assert out_f32.shape == (batch, out_channels, H, W), out_f32.shape
    assert jnp.allclose(out_f32, ref, atol=1e-3, rtol=1e-3), float(
        jnp.max(jnp.abs(out_f32 - ref)))

    # bf16 compute path (default fast path): halved HBM/VMEM bytes, f32 accum.
    out_bf16 = dynamic_spl_conv2d_forward(x, params, num_splits)
    out_bf16 = jax.block_until_ready(out_bf16)
    assert out_bf16.shape == (batch, out_channels, H, W), out_bf16.shape
    assert jnp.allclose(out_bf16, ref, atol=5e-2, rtol=5e-2), float(
        jnp.max(jnp.abs(out_bf16 - ref)))

    print("KERNEL_OK")
</pallas_src>

<mosaic_0001>
module attributes {stable_mosaic.version = 11 : i64} {
  func.func @_dyn_spl_conv_kernel(%arg0: i32, %arg1: memref<1x4x256xf32, #tpu.memory_space<vmem>>, %arg2: memref<9x6x4xf32, #tpu.memory_space<vmem>>, %arg3: memref<6x1xf32, #tpu.memory_space<vmem>>, %arg4: memref<1x6x256xf32, #tpu.memory_space<vmem>>, %arg5: memref<4x512xf32, #tpu.memory_space<vmem>>) attributes {dimension_semantics = [#tpu.dimension_semantics<parallel>], iteration_bounds = array<i64: 2>, scalar_prefetch = 0 : i64, scratch_operands = 1 : i64, tpu.core_type = #tpu.core_type<tc>, window_params = [{transform_indices = @transform_0, window_bounds = array<i64: 1, 4, 256>}, {pipeline_mode = #tpu.pipeline_mode<synchronous>, transform_indices = @transform_1, window_bounds = array<i64: 9, 6, 4>}, {pipeline_mode = #tpu.pipeline_mode<synchronous>, transform_indices = @transform_2, window_bounds = array<i64: 6, 1>}, {transform_indices = @transform_3, window_bounds = array<i64: 1, 6, 256>}]} {
    %cst = arith.constant 0.000000e+00 : f32
    %0 = vector.broadcast %cst : f32 to vector<4x128xf32>
    %c0 = arith.constant 0 : index
    %c0_0 = arith.constant 0 : index
    %1 = vector.load %arg5[%c0, %c0_0] : memref<4x512xf32, #tpu.memory_space<vmem>>, vector<4x128xf32>
    tpu.vector_store %arg5[%c0, %c0_0], %0 {strides = array<i32>} : memref<4x512xf32, #tpu.memory_space<vmem>>, vector<4x128xf32>,
    %c0_1 = arith.constant 0 : index
    %c384 = arith.constant 384 : index
    %2 = vector.load %arg5[%c0_1, %c384] : memref<4x512xf32, #tpu.memory_space<vmem>>, vector<4x128xf32>
    tpu.vector_store %arg5[%c0_1, %c384], %0 {strides = array<i32>} : memref<4x512xf32, #tpu.memory_space<vmem>>, vector<4x128xf32>,
    %c0_2 = arith.constant 0 : index
    %c0_3 = arith.constant 0 : index
    %c0_4 = arith.constant 0 : index
    %3 = vector.load %arg1[%c0_2, %c0_3, %c0_4] : memref<1x4x256xf32, #tpu.memory_space<vmem>>, vector<1x4x256xf32>
    %4 = vector.shape_cast %3 : vector<1x4x256xf32> to vector<4x256xf32>
    %c0_5 = arith.constant 0 : index
    %c128 = arith.constant 128 : index
    %5 = vector.load %arg5[%c0_5, %c128] : memref<4x512xf32, #tpu.memory_space<vmem>>, vector<4x256xf32>
    tpu.vector_store %arg5[%c0_5, %c128], %4 {strides = array<i32>} : memref<4x512xf32, #tpu.memory_space<vmem>>, vector<4x256xf32>,
    %6 = tpu.iota {dimensions = array<i32: 1>} : vector<1x256xi32>
    %c16_i32 = arith.constant 16 : i32
    %c0_i32 = arith.constant 0 : i32
    %7 = arith.cmpi eq, %c16_i32, %c0_i32 : i32
    %c1_i32 = arith.constant 1 : i32
    %8 = arith.select %7, %c1_i32, %c16_i32 : i32
    %9 = vector.broadcast %8 : i32 to vector<1x256xi32>
    %10 = arith.remsi %6, %9 : vector<1x256xi32>
    %c0_i32_6 = arith.constant 0 : i32
    %11 = vector.broadcast %c0_i32_6 : i32 to vector<1x256xi32>
    %12 = arith.cmpi ne, %10, %11 : vector<1x256xi32>
    %c0_i32_7 = arith.constant 0 : i32
    %13 = vector.broadcast %c0_i32_7 : i32 to vector<1x256xi32>
    %14 = arith.cmpi slt, %10, %13 : vector<1x256xi32>
    %c0_i32_8 = arith.constant 0 : i32
    %15 = arith.cmpi slt, %8, %c0_i32_8 : i32
    %16 = vector.broadcast %15 : i1 to vector<1x256xi1>
    %17 = vector.broadcast %16 : vector<1x256xi1> to vector<1x256xi1>
    %18 = arith.xori %14, %17 : vector<1x256xi1>
    %19 = arith.andi %18, %12 : vector<1x256xi1>
    %20 = vector.broadcast %8 : i32 to vector<1x256xi32>
    %21 = arith.addi %10, %20 : vector<1x256xi32>
    %22 = arith.select %19, %21, %10 : vector<1x256xi1>, vector<1x256xi32>
    %c-1_i32 = arith.constant -1 : i32
    %23 = vector.broadcast %c-1_i32 : i32 to vector<1x256xi32>
    %24 = arith.addi %22, %23 : vector<1x256xi32>
    %c0_i32_9 = arith.constant 0 : i32
    %25 = vector.broadcast %c0_i32_9 : i32 to vector<1x256xi32>
    %26 = arith.cmpi sge, %24, %25 : vector<1x256xi32>
    %c-1_i32_10 = arith.constant -1 : i32
    %27 = vector.broadcast %c-1_i32_10 : i32 to vector<1x256xi32>
    %28 = arith.addi %22, %27 : vector<1x256xi32>
    %c16_i32_11 = arith.constant 16 : i32
    %29 = vector.broadcast %c16_i32_11 : i32 to vector<1x256xi32>
    %30 = arith.cmpi slt, %28, %29 : vector<1x256xi32>
    %31 = arith.andi %26, %30 : vector<1x256xi1>
    %c1_i32_12 = arith.constant 1 : i32
    %32 = vector.broadcast %c1_i32_12 : i32 to vector<1x256xi32>
    %33 = arith.addi %22, %32 : vector<1x256xi32>
    %c0_i32_13 = arith.constant 0 : i32
    %34 = vector.broadcast %c0_i32_13 : i32 to vector<1x256xi32>
    %35 = arith.cmpi sge, %33, %34 : vector<1x256xi32>
    %c1_i32_14 = arith.constant 1 : i32
    %36 = vector.broadcast %c1_i32_14 : i32 to vector<1x256xi32>
    %37 = arith.addi %22, %36 : vector<1x256xi32>
    %c16_i32_15 = arith.constant 16 : i32
    %38 = vector.broadcast %c16_i32_15 : i32 to vector<1x256xi32>
    %39 = arith.cmpi slt, %37, %38 : vector<1x256xi32>
    %40 = arith.andi %35, %39 : vector<1x256xi1>
    %c0_16 = arith.constant 0 : index
    %c0_17 = arith.constant 0 : index
    %41 = vector.load %arg3[%c0_16, %c0_17] : memref<6x1xf32, #tpu.memory_space<vmem>>, vector<6x1xf32>
    %42 = vector.shape_cast %41 : vector<6x1xf32> to vector<6x1xf32>
    %43 = vector.broadcast %42 : vector<6x1xf32> to vector<6x256xf32>
    %c0_18 = arith.constant 0 : index
    %c111 = arith.constant 111 : index
    %44 = vector.load %arg5[%c0_18, %c111] : memref<4x512xf32, #tpu.memory_space<vmem>>, vector<4x256xf32>
    %cst_19 = arith.constant 0.000000e+00 : f32
    %45 = vector.broadcast %cst_19 : f32 to vector<4x256xf32>
    %46 = vector.shape_cast %31 : vector<1x256xi1> to vector<1x256xi1>
    %47 = vector.broadcast %46 : vector<1x256xi1> to vector<4x256xi1>
    %48 = arith.select %47, %44, %45 : vector<4x256xi1>, vector<4x256xf32>
    %c0_20 = arith.constant 0 : index
    %c0_21 = arith.constant 0 : index
    %c0_22 = arith.constant 0 : index
    %49 = vector.load %arg2[%c0_20, %c0_21, %c0_22] : memref<9x6x4xf32, #tpu.memory_space<vmem>>, vector<1x6x4xf32>
    %50 = vector.shape_cast %49 : vector<1x6x4xf32> to vector<6x4xf32>
    %cst_23 = arith.constant dense<0.000000e+00> : vector<6x256xf32>
    %51 = tpu.matmul %50, %48, %cst_23 {dimension_numbers = #tpu.dot_dimension_numbers<[1], [0], [0], [1], [0, 0, 1, 1], [], []>} : vector<6x4xf32>, vector<4x256xf32>, vector<6x256xf32> -> vector<6x256xf32>
    %52 = arith.addf %43, %51 : vector<6x256xf32>
    %c0_24 = arith.constant 0 : index
    %c112 = arith.constant 112 : index
    %53 = vector.load %arg5[%c0_24, %c112] : memref<4x512xf32, #tpu.memory_space<vmem>>, vector<4x256xf32>
    %c1 = arith.constant 1 : index
    %c0_25 = arith.constant 0 : index
    %c0_26 = arith.constant 0 : index
    %54 = vector.load %arg2[%c1, %c0_25, %c0_26] : memref<9x6x4xf32, #tpu.memory_space<vmem>>, vector<1x6x4xf32>
    %55 = vector.shape_cast %54 : vector<1x6x4xf32> to vector<6x4xf32>
    %cst_27 = arith.constant dense<0.000000e+00> : vector<6x256xf32>
    %56 = tpu.matmul %55, %53, %cst_27 {dimension_numbers = #tpu.dot_dimension_numbers<[1], [0], [0], [1], [0, 0, 1, 1], [], []>} : vector<6x4xf32>, vector<4x256xf32>, vector<6x256xf32> -> vector<6x256xf32>
    %57 = arith.addf %52, %56 : vector<6x256xf32>
    %c0_28 = arith.constant 0 : index
    %c113 = arith.constant 113 : index
    %58 = vector.load %arg5[%c0_28, %c113] : memref<4x512xf32, #tpu.memory_space<vmem>>, vector<4x256xf32>
    %cst_29 = arith.constant 0.000000e+00 : f32
    %59 = vector.broadcast %cst_29 : f32 to vector<4x256xf32>
    %60 = vector.shape_cast %40 : vector<1x256xi1> to vector<1x256xi1>
    %61 = vector.broadcast %60 : vector<1x256xi1> to vector<4x256xi1>
    %62 = arith.select %61, %58, %59 : vector<4x256xi1>, vector<4x256xf32>
    %c2 = arith.constant 2 : index
    %c0_30 = arith.constant 0 : index
    %c0_31 = arith.constant 0 : index
    %63 = vector.load %arg2[%c2, %c0_30, %c0_31] : memref<9x6x4xf32, #tpu.memory_space<vmem>>, vector<1x6x4xf32>
    %64 = vector.shape_cast %63 : vector<1x6x4xf32> to vector<6x4xf32>
    %cst_32 = arith.constant dense<0.000000e+00> : vector<6x256xf32>
    %65 = tpu.matmul %64, %62, %cst_32 {dimension_numbers = #tpu.dot_dimension_numbers<[1], [0], [0], [1], [0, 0, 1, 1], [], []>} : vector<6x4xf32>, vector<4x256xf32>, vector<6x256xf32> -> vector<6x256xf32>
    %66 = arith.addf %57, %65 : vector<6x256xf32>
    %c0_33 = arith.constant 0 : index
    %c127 = arith.constant 127 : index
    %67 = vector.load %arg5[%c0_33, %c127] : memref<4x512xf32, #tpu.memory_space<vmem>>, vector<4x256xf32>
    %cst_34 = arith.constant 0.000000e+00 : f32
    %68 = vector.broadcast %cst_34 : f32 to vector<4x256xf32>
    %69 = vector.shape_cast %31 : vector<1x256xi1> to vector<1x256xi1>
    %70 = vector.broadcast %69 : vector<1x256xi1> to vector<4x256xi1>
    %71 = arith.select %70, %67, %68 : vector<4x256xi1>, vector<4x256xf32>
    %c3 = arith.constant 3 : index
    %c0_35 = arith.constant 0 : index
    %c0_36 = arith.constant 0 : index
    %72 = vector.load %arg2[%c3, %c0_35, %c0_36] : memref<9x6x4xf32, #tpu.memory_space<vmem>>, vector<1x6x4xf32>
    %73 = vector.shape_cast %72 : vector<1x6x4xf32> to vector<6x4xf32>
    %cst_37 = arith.constant dense<0.000000e+00> : vector<6x256xf32>
    %74 = tpu.matmul %73, %71, %cst_37 {dimension_numbers = #tpu.dot_dimension_numbers<[1], [0], [0], [1], [0, 0, 1, 1], [], []>} : vector<6x4xf32>, vector<4x256xf32>, vector<6x256xf32> -> vector<6x256xf32>
    %75 = arith.addf %66, %74 : vector<6x256xf32>
    %c0_38 = arith.constant 0 : index
    %c128_39 = arith.constant 128 : index
    %76 = vector.load %arg5[%c0_38, %c128_39] : memref<4x512xf32, #tpu.memory_space<vmem>>, vector<4x256xf32>
    %c4 = arith.constant 4 : index
    %c0_40 = arith.constant 0 : index
    %c0_41 = arith.constant 0 : index
    %77 = vector.load %arg2[%c4, %c0_40, %c0_41] : memref<9x6x4xf32, #tpu.memory_space<vmem>>, vector<1x6x4xf32>
    %78 = vector.shape_cast %77 : vector<1x6x4xf32> to vector<6x4xf32>
    %cst_42 = arith.constant dense<0.000000e+00> : vector<6x256xf32>
    %79 = tpu.matmul %78, %76, %cst_42 {dimension_numbers = #tpu.dot_dimension_numbers<[1], [0], [0], [1], [0, 0, 1, 1], [], []>} : vector<6x4xf32>, vector<4x256xf32>, vector<6x256xf32> -> vector<6x256xf32>
    %80 = arith.addf %75, %79 : vector<6x256xf32>
    %c0_43 = arith.constant 0 : index
    %c129 = arith.constant 129 : index
    %81 = vector.load %arg5[%c0_43, %c129] : memref<4x512xf32, #tpu.memory_space<vmem>>, vector<4x256xf32>
    %cst_44 = arith.constant 0.000000e+00 : f32
    %82 = vector.broadcast %cst_44 : f32 to vector<4x256xf32>
    %83 = vector.shape_cast %40 : vector<1x256xi1> to vector<1x256xi1>
    %84 = vector.broadcast %83 : vector<1x256xi1> to vector<4x256xi1>
    %85 = arith.select %84, %81, %82 : vector<4x256xi1>, vector<4x256xf32>
    %c5 = arith.constant 5 : index
    %c0_45 = arith.constant 0 : index
    %c0_46 = arith.constant 0 : index
    %86 = vector.load %arg2[%c5, %c0_45, %c0_46] : memref<9x6x4xf32, #tpu.memory_space<vmem>>, vector<1x6x4xf32>
    %87 = vector.shape_cast %86 : vector<1x6x4xf32> to vector<6x4xf32>
    %cst_47 = arith.constant dense<0.000000e+00> : vector<6x256xf32>
    %88 = tpu.matmul %87, %85, %cst_47 {dimension_numbers = #tpu.dot_dimension_numbers<[1], [0], [0], [1], [0, 0, 1, 1], [], []>} : vector<6x4xf32>, vector<4x256xf32>, vector<6x256xf32> -> vector<6x256xf32>
    %89 = arith.addf %80, %88 : vector<6x256xf32>
    %c0_48 = arith.constant 0 : index
    %c143 = arith.constant 143 : index
    %90 = vector.load %arg5[%c0_48, %c143] : memref<4x512xf32, #tpu.memory_space<vmem>>, vector<4x256xf32>
    %cst_49 = arith.constant 0.000000e+00 : f32
    %91 = vector.broadcast %cst_49 : f32 to vector<4x256xf32>
    %92 = vector.shape_cast %31 : vector<1x256xi1> to vector<1x256xi1>
    %93 = vector.broadcast %92 : vector<1x256xi1> to vector<4x256xi1>
    %94 = arith.select %93, %90, %91 : vector<4x256xi1>, vector<4x256xf32>
    %c6 = arith.constant 6 : index
    %c0_50 = arith.constant 0 : index
    %c0_51 = arith.constant 0 : index
    %95 = vector.load %arg2[%c6, %c0_50, %c0_51] : memref<9x6x4xf32, #tpu.memory_space<vmem>>, vector<1x6x4xf32>
    %96 = vector.shape_cast %95 : vector<1x6x4xf32> to vector<6x4xf32>
    %cst_52 = arith.constant dense<0.000000e+00> : vector<6x256xf32>
    %97 = tpu.matmul %96, %94, %cst_52 {dimension_numbers = #tpu.dot_dimension_numbers<[1], [0], [0], [1], [0, 0, 1, 1], [], []>} : vector<6x4xf32>, vector<4x256xf32>, vector<6x256xf32> -> vector<6x256xf32>
    %98 = arith.addf %89, %97 : vector<6x256xf32>
    %c0_53 = arith.constant 0 : index
    %c144 = arith.constant 144 : index
    %99 = vector.load %arg5[%c0_53, %c144] : memref<4x512xf32, #tpu.memory_space<vmem>>, vector<4x256xf32>
    %c7 = arith.constant 7 : index
    %c0_54 = arith.constant 0 : index
    %c0_55 = arith.constant 0 : index
    %100 = vector.load %arg2[%c7, %c0_54, %c0_55] : memref<9x6x4xf32, #tpu.memory_space<vmem>>, vector<1x6x4xf32>
    %101 = vector.shape_cast %100 : vector<1x6x4xf32> to vector<6x4xf32>
    %cst_56 = arith.constant dense<0.000000e+00> : vector<6x256xf32>
    %102 = tpu.matmul %101, %99, %cst_56 {dimension_numbers = #tpu.dot_dimension_numbers<[1], [0], [0], [1], [0, 0, 1, 1], [], []>} : vector<6x4xf32>, vector<4x256xf32>, vector<6x256xf32> -> vector<6x256xf32>
    %103 = arith.addf %98, %102 : vector<6x256xf32>
    %c0_57 = arith.constant 0 : index
    %c145 = arith.constant 145 : index
    %104 = vector.load %arg5[%c0_57, %c145] : memref<4x512xf32, #tpu.memory_space<vmem>>, vector<4x256xf32>
    %cst_58 = arith.constant 0.000000e+00 : f32
    %105 = vector.broadcast %cst_58 : f32 to vector<4x256xf32>
    %106 = vector.shape_cast %40 : vector<1x256xi1> to vector<1x256xi1>
    %107 = vector.broadcast %106 : vector<1x256xi1> to vector<4x256xi1>
    %108 = arith.select %107, %104, %105 : vector<4x256xi1>, vector<4x256xf32>
    %c8 = arith.constant 8 : index
    %c0_59 = arith.constant 0 : index
    %c0_60 = arith.constant 0 : index
    %109 = vector.load %arg2[%c8, %c0_59, %c0_60] : memref<9x6x4xf32, #tpu.memory_space<vmem>>, vector<1x6x4xf32>
    %110 = vector.shape_cast %109 : vector<1x6x4xf32> to vector<6x4xf32>
    %cst_61 = arith.constant dense<0.000000e+00> : vector<6x256xf32>
    %111 = tpu.matmul %110, %108, %cst_61 {dimension_numbers = #tpu.dot_dimension_numbers<[1], [0], [0], [1], [0, 0, 1, 1], [], []>} : vector<6x4xf32>, vector<4x256xf32>, vector<6x256xf32> -> vector<6x256xf32>
    %112 = arith.addf %103, %111 : vector<6x256xf32>
    %cst_62 = arith.constant 0.000000e+00 : f32
    %113 = vector.broadcast %cst_62 : f32 to vector<6x256xf32>
    %114 = arith.maximumf %112, %113 : vector<6x256xf32>
    %c0_63 = arith.constant 0 : index
    %c0_64 = arith.constant 0 : index
    %c0_65 = arith.constant 0 : index
    %115 = vector.load %arg4[%c0_63, %c0_64, %c0_65] : memref<1x6x256xf32, #tpu.memory_space<vmem>>, vector<1x6x256xf32>
    %116 = vector.shape_cast %115 : vector<1x6x256xf32> to vector<6x256xf32>
    %117 = vector.shape_cast %114 : vector<6x256xf32> to vector<1x6x256xf32>
    tpu.vector_store %arg4[%c0_63, %c0_64, %c0_65], %117 {strides = array<i32>} : memref<1x6x256xf32, #tpu.memory_space<vmem>>, vector<1x6x256xf32>,
    return
  }
  func.func @transform_0(%arg0: i32) -> (i32, i32, i32) {
    %c0_i32 = arith.constant 0 : i32
    %c0_i32_0 = arith.constant 0 : i32
    %c0_i32_1 = arith.constant 0 : i32
    return %arg0, %c0_i32, %c0_i32_0 : i32, i32, i32
  }
  func.func @transform_1(%arg0: i32) -> (i32, i32, i32) {
    %c0_i32 = arith.constant 0 : i32
    %c0_i32_0 = arith.constant 0 : i32
    %c0_i32_1 = arith.constant 0 : i32
    %c0_i32_2 = arith.constant 0 : i32
    return %c0_i32, %c0_i32_0, %c0_i32_1 : i32, i32, i32
  }
  func.func @transform_2(%arg0: i32) -> (i32, i32) {
    %c0_i32 = arith.constant 0 : i32
    %c0_i32_0 = arith.constant 0 : i32
    %c0_i32_1 = arith.constant 0 : i32
    return %c0_i32, %c0_i32_0 : i32, i32
  }
  func.func @transform_3(%arg0: i32) -> (i32, i32, i32) {
    %c0_i32 = arith.constant 0 : i32
    %c0_i32_0 = arith.constant 0 : i32
    %c0_i32_1 = arith.constant 0 : i32
    return %arg0, %c0_i32, %c0_i32_0 : i32, i32, i32
  }
}

</mosaic_0001>

<llo_original>
// kernel: tpu_custom_call.1
$region0: #{tpu_custom_call.1}
  #allocation0 [shape = 'u32[]', space=smem, size = 0x4, offset = 0x4, fixed_abs, tag = 'smem constant byte address 0x4 - core index']
  #allocation1 [shape = 'u32[144,128]{1,0:T(1,128)}', space=vmem, size = 0x12000, scoped, tag = 'internal scratch']
  #allocation2 [shape = 'f32[4,512]{1,0:T(4,128)}', space=vmem, size = 0x2000, scoped, tag = 'scratch operand']
  %s0 = inlined_call_operand.vmem [shape: f32[2,4,256], index: 0, kind: input, shape index: {}]
  %s1 = inlined_call_operand.vmem [shape: f32[9,6,4], index: 1, kind: input, shape index: {}]
  %s2 = inlined_call_operand.vmem [shape: f32[6,1], index: 2, kind: input, shape index: {}]
  %s3 = inlined_call_operand.vmem [shape: f32[2,6,256], index: 3, kind: output, shape index: {}]
  %s4 = sld [smem:[#allocation0]]
  $region45: #{tpu_custom_call.1} parent=0
    _
  %s6 = ssub.s32 1, %s4
  %s7 = scalar_select 0, %s6, %s4
  loop: start=0, step=1, limit=4
  $region2: #{tpu_custom_call.1} parent=0 // loop_pre_header
    _
  $region3: #{tpu_custom_call.1} parent=0 // loop_header
    %s9 = sphi 0, %s13
    %p10 = scmp.ge.s32.totalorder %s9, 4
    %s19 = sphi 0, %s21
    %s22 = sphi 0, %s19
    %s23 = sphi 0, %s22
    %s39 = sphi 0, %s23
    %s43 = sphi 0, %s43
    %s45 = sphi 0, %s43
    %s46 = sphi 0, %s45
    %s60 = sphi 0, %s46
    %s64 = sphi 0, %s64
    %s66 = sphi 0, %s64
    %s67 = sphi 0, %s66
    %s81 = sphi 0, %s67
    %s87 = sphi 0, %s89
    %s90 = sphi 0, %s87
    %s91 = sphi 0, %s90
    %s107 = sphi 0, %s91
  $region4: #{tpu_custom_call.1} parent=0 // loop_header_branch
    %12 = sbr.rel (%p10) target = $region8
  $region5: #{tpu_custom_call.1} parent=0 // loop_body
    %s14 = ssub.s32 %s9, 1
    %s15 = ssub.s32 %s9, 2
    %s16 = sadd.s32 %s9, 1
    %s17 = ssub.s32 %s9, %s16
    %p18 = scmp.eq.s32.totalorder %s17, 0
    %s20 = sadd.s32 %s19, 1
    %s21 = scalar_select %p18, %s19, %s20
    %p24 = pneg %p18
    %p25 = scmp.eq.s32.totalorder %s9, 1
    %p26 = por %p24, %p25
    %p27 = scmp.ne.s32.totalorder %s19, %s22
    %p28 = scmp.eq.s32.totalorder %s9, 0
    %p29 = por %p27, %p28
    %p30 = scmp.ne.s32.totalorder %s19, %s22
    %p31 = scmp.eq.s32.totalorder %s14, 1
    %p32 = por %p30, %p31
    %p33 = scmp.ne.s32.totalorder %s22, %s23
    %p34 = scmp.eq.s32.totalorder %s14, 0
    %p35 = por %p33, %p34
    %p36 = scmp.ne.s32.totalorder %s22, %s23
    %p37 = scmp.eq.s32.totalorder %s15, 1
    %p38 = por %p36, %p37
    %p40 = scmp.ne.s32.totalorder %s23, %s39
    %p41 = scmp.eq.s32.totalorder %s15, 0
    %p42 = por %p40, %p41
    %s44 = sadd.s32 %s43, 1
    %p47 = scmp.eq.s32.totalorder %s9, 1
    %p48 = scmp.ne.s32.totalorder %s43, %s45
    %p49 = scmp.eq.s32.totalorder %s9, 0
    %p50 = por %p48, %p49
    %p51 = scmp.ne.s32.totalorder %s43, %s45
    %p52 = scmp.eq.s32.totalorder %s14, 1
    %p53 = por %p51, %p52
    %p54 = scmp.ne.s32.totalorder %s45, %s46
    %p55 = scmp.eq.s32.totalorder %s14, 0
    %p56 = por %p54, %p55
    %p57 = scmp.ne.s32.totalorder %s45, %s46
    %p58 = scmp.eq.s32.totalorder %s15, 1
    %p59 = por %p57, %p58
    %p61 = scmp.ne.s32.totalorder %s46, %s60
    %p62 = scmp.eq.s32.totalorder %s15, 0
    %p63 = por %p61, %p62
    %s65 = sadd.s32 %s64, 1
    %p68 = scmp.eq.s32.totalorder %s9, 1
    %p69 = scmp.ne.s32.totalorder %s64, %s66
    %p70 = scmp.eq.s32.totalorder %s9, 0
    %p71 = por %p69, %p70
    %p72 = scmp.ne.s32.totalorder %s64, %s66
    %p73 = scmp.eq.s32.totalorder %s14, 1
    %p74 = por %p72, %p73
    %p75 = scmp.ne.s32.totalorder %s66, %s67
    %p76 = scmp.eq.s32.totalorder %s14, 0
    %p77 = por %p75, %p76
    %p78 = scmp.ne.s32.totalorder %s66, %s67
    %p79 = scmp.eq.s32.totalorder %s15, 1
    %p80 = por %p78, %p79
    %p82 = scmp.ne.s32.totalorder %s67, %s81
    %p83 = scmp.eq.s32.totalorder %s15, 0
    %p84 = por %p82, %p83
    %s85 = ssub.s32 %s9, %s16
    %p86 = scmp.eq.s32.totalorder %s85, 0
    %s88 = sadd.s32 %s87, 1
    %s89 = scalar_select %p86, %s87, %s88
    %p92 = pneg %p86
    %p93 = scmp.eq.s32.totalorder %s9, 1
    %p94 = por %p92, %p93
    %p95 = scmp.ne.s32.totalorder %s87, %s90
    %p96 = scmp.eq.s32.totalorder %s9, 0
    %p97 = por %p95, %p96
    %p98 = scmp.ne.s32.totalorder %s87, %s90
    %p99 = scmp.eq.s32.totalorder %s14, 1
    %p100 = por %p98, %p99
    %p101 = scmp.ne.s32.totalorder %s90, %s91
    %p102 = scmp.eq.s32.totalorder %s14, 0
    %p103 = por %p101, %p102
    %p104 = scmp.ne.s32.totalorder %s90, %s91
    %p105 = scmp.eq.s32.totalorder %s15, 1
    %p106 = por %p104, %p105
    %p108 = scmp.ne.s32.totalorder %s91, %s107
    %p109 = scmp.eq.s32.totalorder %s15, 0
    %p110 = por %p108, %p109
    %p111 = scmp.le.s32.totalorder 1, %s9
    %p112 = scmp.lt.s32.totalorder %s9, 3
    %p113 = pnand %p111, %p112
    %p114 = pneg %p113
    // Predicated region
    $region9: #{tpu_custom_call.1} parent=5 // pred_check
      _
    $region10: #{tpu_custom_call.1} parent=5 // pred_check_branch
      %116 = sbr.rel (%p113) target = $region12
    $region11: #{tpu_custom_call.1} parent=5 // pred_region
      %s117 = ssub.s32 %s9, 1
      // Predicated region
      $region13: #{tpu_custom_call.1} parent=11 // pred_check
        %p118 = pneg %p56
      $region14: #{tpu_custom_call.1} parent=11 // pred_check_branch
        %120 = sbr.rel (%p118) target = $region16
      $region15: #{tpu_custom_call.1} parent=11 // pred_region
        _
      $region16: #{tpu_custom_call.1} parent=11 // pred_fallthru
        _
      // Predicated region
      $region17: #{tpu_custom_call.1} parent=11 // pred_check
        %p121 = pneg %p77
      $region18: #{tpu_custom_call.1} parent=11 // pred_check_branch
        %123 = sbr.rel (%p121) target = $region20
      $region19: #{tpu_custom_call.1} parent=11 // pred_region
        _
      $region20: #{tpu_custom_call.1} parent=11 // pred_fallthru
        _
    $region12: #{tpu_custom_call.1} parent=5 // pred_fallthru
      _
    %p124 = scmp.lt.s32.totalorder %s9, 2
    // Predicated region
    $region21: #{tpu_custom_call.1} parent=5 // pred_check
      %p125 = pneg %p124
    $region22: #{tpu_custom_call.1} parent=5 // pred_check_branch
      %127 = sbr.rel (%p125) target = $region24
    $region23: #{tpu_custom_call.1} parent=5 // pred_region
      // Predicated region
      $region25: #{tpu_custom_call.1} parent=23 // pred_check
        %p128 = pneg %p29
      $region26: #{tpu_custom_call.1} parent=23 // pred_check_branch
        %130 = sbr.rel (%p128) target = $region28
      $region27: #{tpu_custom_call.1} parent=23 // pred_region
        %p131 = scmp.lt.s32.totalorder %s9, 1
        %s132 = scalar_select %p131, %s9, 1
        %s133 = smul.addr %s132, 2
        %s134 = smul.addr %s133, 4
        %s135 = scalar_lea.vmem %s0, %s134
      $region28: #{tpu_custom_call.1} parent=23 // pred_fallthru
        _
    $region24: #{tpu_custom_call.1} parent=5 // pred_fallthru
      _
    %p136 = scmp.le.s32.totalorder 1, %s9
    %p137 = scmp.lt.s32.totalorder %s9, 3
    %p138 = pnand %p136, %p137
    %p139 = pneg %p138
    // Predicated region
    $region29: #{tpu_custom_call.1} parent=5 // pred_check
      _
    $region30: #{tpu_custom_call.1} parent=5 // pred_check_branch
      %141 = sbr.rel (%p138) target = $region32
    $region31: #{tpu_custom_call.1} parent=5 // pred_region
      %s142 = ssub.s32 %s9, 1
      %p143 = scmp.lt.s32.totalorder %s14, 1
      %s144 = scalar_select %p143, %s14, 1
      %s145 = smul.addr %s144, 2
      %s146 = smul.addr %s145, 4
      %s147 = scalar_lea.vmem %s0, %s146
      %p148 = pneg %p35
      %p149 = pneg %p32
      %p150 = pneg %p56
      %p151 = pneg %p53
      %p152 = pneg %p77
      %p153 = pneg %p74
      %p154 = pneg %p103
      %p155 = pneg %p100
      %p156 = scmp.lt.s32.totalorder %s14, 1
      %s157 = scalar_select %p156, %s14, 1
      %s158 = smul.addr %s157, 2
      %s159 = smul.addr %s158, 8
      %s160 = scalar_lea.vmem %s3, %s159
      %p161 = scmp.lt.s32.totalorder %s14, 1
      %s162 = scalar_select %p161, %s14, 1
      %s163 = smul.addr %s162, 2
      %s164 = smul.addr %s163, 4
      %s165 = scalar_lea.vmem %s0, %s164
      %p166 = scmp.lt.s32.totalorder %s14, 1
      %s167 = scalar_select %p166, %s14, 1
      %s168 = smul.addr %s167, 2
      %s169 = smul.addr %s168, 8
      %s170 = scalar_lea.vmem %s3, %s169
      %171 = vst [vmem:[#allocation2] sm:$0xf] 0.0
      %172 = vst [vmem:[#allocation2 + $0xc] sm:$0xf] 0.0
      %v173 = vld [vmem:[%s165] sm:$0xff]
      %174 = vst [vmem:[#allocation2 + $0x4] sm:$0xff] %v173
      %v175 = vlaneseq
      %v176 = vand.u32 %v175, 127
      %v177 = vadd.s32 %v176, 128
      %vm178 = vcmp.lt.s32.totalorder %v176, 0
      %v179 = vsub.s32 0, %v176
      %v180 = vsel %vm178, %v179, %v176
      %v181 = vshrl.u32 %v180, 4
      %v182 = vand.u32 %v180, 15
      %v183 = vsub.s32 0, %v182
      %v184 = vsel %vm178, %v183, %v182
      %vm185 = vcmp.lt.s32.totalorder %v177, 0
      %v186 = vsub.s32 0, %v177
      %v187 = vsel %vm185, %v186, %v177
      %v188 = vshrl.u32 %v187, 4
      %v189 = vand.u32 %v187, 15
      %v190 = vsub.s32 0, %v189
      %v191 = vsel %vm185, %v190, %v189
      %vm192 = vcmp.ne.s32.totalorder %v184, 0
      %vm193 = vcmp.ne.s32.totalorder %v191, 0
      %vm194 = vcmp.lt.s32.totalorder %v184, 0
      %vm195 = vcmp.lt.s32.totalorder %v191, 0
      %vm196 = vmand %vm194, %vm192
      %vm197 = vmand %vm195, %vm193
      %v198 = vadd.s32 %v184, 16
      %v199 = vadd.s32 %v191, 16
      %v200 = vsel %vm196, %v198, %v184
      %v201 = vsel %vm197, %v199, %v191
      %v202 = vadd.s32 %v200, 4294967295
      %v203 = vadd.s32 %v201, 4294967295
      %vm204 = vcmp.ge.s32.totalorder %v202, 0
      %vm205 = vcmp.ge.s32.totalorder %v203, 0
      %vm206 = vcmp.lt.s32.totalorder %v202, 16
      %vm207 = vcmp.lt.s32.totalorder %v203, 16
      %vm208 = vmand %vm204, %vm206
      %vm209 = vmand %vm205, %vm207
      %v210 = vadd.s32 %v200, 1
      %v211 = vadd.s32 %v201, 1
      %vm212 = vcmp.ge.s32.totalorder %v210, 0
      %vm213 = vcmp.ge.s32.totalorder %v211, 0
      %vm214 = vcmp.lt.s32.totalorder %v210, 16
      %vm215 = vcmp.lt.s32.totalorder %v211, 16
      %vm216 = vmand %vm212, %vm214
      %vm217 = vmand %vm213, %vm215
      %v218 = vld [vmem:[%s2] sm:$0x3f]
      %220 = vset.pattern.permute.xlu0 0
      %221 = vperm.xlu0 %220, %v218
      %v222 = vpop.permute.xlu0 %221
      %v224 = vld [vmem:[#allocation2] sm:$0xff]
      %v225 = vld [vmem:[#allocation2 + $0x8] sm:$0xf]
      %v226 = vsel %vm208, 1, 0
      %v227 = vsel %vm209, 1, 0
      %vm228 = vcmp.eq.s32.totalorder %v226, 1
      %vm229 = vcmp.eq.s32.totalorder %v227, 1
      %v232 = vcombine.high %v224, %v224
      %233 = vrot.lane.b32.xlu0 %v224, 17
      %v234 = vpop.permute.xlu0 %233
      %235 = vrot.lane.b32.xlu0 %v232, 17
      %v236 = vpop.permute.xlu0 %235
      %237 = vrot.lane.b32.xlu0 %v225, 17
      %v238 = vpop.permute.xlu0 %237
      %vm239 = vcmask 138240
      %v240 = vsel %vm239, %v234, %v236
      %v241 = vsel %vm239, %v236, %v238
      %v244 = vsel %vm228, %v240, 0.0
      %v245 = vsel %vm229, %v241, 0.0
      %v246 = vld [vmem:[%s1] sm:$0x3f]
      %vm247 = vcmask 31744
      %v249 = vsel %vm247, %v246, 0
      %vm251 = vcmask 1043456
      %v253 = vsel %vm251, %v244, 0
      %v256 = vsel %vm251, %v245, 0
      %258 = vmatprep.subr.mxu0 %v256
      %259 = vmatpush1.msra.mxu0 %v253
      %260 = vmatprep.subr.mxu0 0.0
      %261 = vmatpush1.msra.mxu0 0.0
      %262 = vmatprep.subr.mxu0 0.0
      %263 = vmatpush1.msra.mxu0 0.0
      %264 = vmatprep.subr.mxu0 0.0
      %265 = vmatpush1.msra.mxu0 0.0
      %266 = vmatprep.subr.mxu0 0.0
      %267 = vmatpush1.msra.mxu0 0.0
      %268 = vmatprep.subr.mxu0 0.0
      %269 = vmatpush1.msra.mxu0 0.0
      %270 = vmatprep.subr.mxu0 0.0
      %271 = vmatpush1.msra.mxu0 0.0
      %272 = vmatprep.subr.mxu0 0.0
      %273 = vmatpush1.msra.mxu0 0.0
      %274 = vmatprep.subr.mxu0 0.0
      %275 = vmatpush1.msra.mxu0 0.0
      %276 = vmatprep.subr.mxu0 0.0
      %277 = vmatpush1.msra.mxu0 0.0
      %278 = vmatprep.subr.mxu0 0.0
      %279 = vmatpush1.msra.mxu0 0.0
      %280 = vmatprep.subr.mxu0 0.0
      %281 = vmatpush1.msra.mxu0 0.0
      %282 = vmatprep.subr.mxu0 0.0
      %283 = vmatpush1.msra.mxu0 0.0
      %284 = vmatprep.subr.mxu0 0.0
      %285 = vmatpush1.msra.mxu0 0.0
      %286 = vmatprep.subr.mxu0 0.0
      %287 = vmatpush1.msra.mxu0 0.0
      %288 = vmatprep.subr.mxu0 0.0
      %289 = vmatpush1.msra.mxu0 0.0
      %290 = vmatprep.subr.mxu0 0.0
      %291 = vmatpush1.msra.mxu0 0.0
      %292 = vmatprep.subr.mxu0 0.0
      %293 = vmatpush1.msra.mxu0 0.0
      %294 = vmatprep.subr.mxu0 0.0
      %295 = vmatpush1.msra.mxu0 0.0
      %296 = vmatprep.subr.mxu0 0.0
      %297 = vmatpush1.msra.mxu0 0.0
      %298 = vmatprep.subr.mxu0 0.0
      %299 = vmatpush1.msra.mxu0 0.0
      %300 = vmatprep.subr.mxu0 0.0
      %301 = vmatpush1.msra.mxu0 0.0
      %302 = vmatprep.subr.mxu0 0.0
      %303 = vmatpush1.msra.mxu0 0.0
      %304 = vmatprep.subr.mxu0 0.0
      %305 = vmatpush1.msra.mxu0 0.0
      %306 = vmatprep.subr.mxu0 0.0
      %307 = vmatpush1.msra.mxu0 0.0
      %308 = vmatprep.subr.mxu0 0.0
      %309 = vmatpush1.msra.mxu0 0.0
      %310 = vmatprep.subr.mxu0 0.0
      %311 = vmatpush1.msra.mxu0 0.0
      %312 = vmatprep.subr.mxu0 0.0
      %313 = vmatpush1.msra.mxu0 0.0
      %314 = vmatprep.subr.mxu0 0.0
      %315 = vmatpush1.msra.mxu0 0.0
      %316 = vmatprep.subr.mxu0 0.0
      %317 = vmatpush1.msra.mxu0 0.0
      %318 = vmatprep.subr.mxu0 0.0
      %319 = vmatpush1.msra.mxu0 0.0
      %320 = vmatprep.subr.mxu0 0.0
      %321 = vmatpush1.msra.mxu0 0.0
      %322 = vmatprep.mubr.f32.mxu0 0.0
      %323 = vmatmul.mubr.f32.gmra.mrb[0].mxu0 %v249
      %v324 = vpop.f32.mrb[0].mxu0
      %v325 = vadd.f32 0.0, %v324
      %v326 = vpop.f32.mrb[0].mxu0
      %v327 = vadd.f32 0.0, %v326
      %328 = vdwg.mxu0
      %v329 = vadd.f32 %v222, %v325
      %v330 = vadd.f32 %v222, %v327
      %v331 = vld [vmem:[#allocation2] sm:$0xff]
      %v332 = vld [vmem:[#allocation2 + $0x8] sm:$0xf]
      %s333 = scalar_lea.vmem %s1, 8
      %v334 = vld [vmem:[%s333] sm:$0x3f]
      %v337 = vcombine.high %v331, %v331
      %338 = vrot.lane.b32.xlu0 %v331, 16
      %v339 = vpop.permute.xlu0 %338
      %340 = vrot.lane.b32.xlu0 %v337, 16
      %v341 = vpop.permute.xlu0 %340
      %342 = vrot.lane.b32.xlu0 %v332, 16
      %v343 = vpop.permute.xlu0 %342
      %vm344 = vcmask 130048
      %v345 = vsel %vm344, %v339, %v341
      %v346 = vsel %vm344, %v341, %v343
      %v348 = vsel %vm247, %v334, 0
      %v350 = vsel %vm251, %v345, 0
      %v352 = vsel %vm251, %v346, 0
      %354 = vmatprep.subr.mxu0 %v352
      %355 = vmatpush1.msra.mxu0 %v350
      %356 = vmatprep.subr.mxu0 0.0
      %357 = vmatpush1.msra.mxu0 0.0
      %358 = vmatprep.subr.mxu0 0.0
      %359 = vmatpush1.msra.mxu0 0.0
      %360 = vmatprep.subr.mxu0 0.0
      %361 = vmatpush1.msra.mxu0 0.0
      %362 = vmatprep.subr.mxu0 0.0
      %363 = vmatpush1.msra.mxu0 0.0
      %364 = vmatprep.subr.mxu0 0.0
      %365 = vmatpush1.msra.mxu0 0.0
      %366 = vmatprep.subr.mxu0 0.0
      %367 = vmatpush1.msra.mxu0 0.0
      %368 = vmatprep.subr.mxu0 0.0
      %369 = vmatpush1.msra.mxu0 0.0
      %370 = vmatprep.subr.mxu0 0.0
      %371 = vmatpush1.msra.mxu0 0.0
      %372 = vmatprep.subr.mxu0 0.0
      %373 = vmatpush1.msra.mxu0 0.0
      %374 = vmatprep.subr.mxu0 0.0
      %375 = vmatpush1.msra.mxu0 0.0
      %376 = vmatprep.subr.mxu0 0.0
      %377 = vmatpush1.msra.mxu0 0.0
      %378 = vmatprep.subr.mxu0 0.0
      %379 = vmatpush1.msra.mxu0 0.0
      %380 = vmatprep.subr.mxu0 0.0
      %381 = vmatpush1.msra.mxu0 0.0
      %382 = vmatprep.subr.mxu0 0.0
      %383 = vmatpush1.msra.mxu0 0.0
      %384 = vmatprep.subr.mxu0 0.0
      %385 = vmatpush1.msra.mxu0 0.0
      %386 = vmatprep.subr.mxu0 0.0
      %387 = vmatpush1.msra.mxu0 0.0
      %388 = vmatprep.subr.mxu0 0.0
      %389 = vmatpush1.msra.mxu0 0.0
      %390 = vmatprep.subr.mxu0 0.0
      %391 = vmatpush1.msra.mxu0 0.0
      %392 = vmatprep.subr.mxu0 0.0
      %393 = vmatpush1.msra.mxu0 0.0
      %394 = vmatprep.subr.mxu0 0.0
      %395 = vmatpush1.msra.mxu0 0.0
      %396 = vmatprep.subr.mxu0 0.0
      %397 = vmatpush1.msra.mxu0 0.0
      %398 = vmatprep.subr.mxu0 0.0
      %399 = vmatpush1.msra.mxu0 0.0
      %400 = vmatprep.subr.mxu0 0.0
      %401 = vmatpush1.msra.mxu0 0.0
      %402 = vmatprep.subr.mxu0 0.0
      %403 = vmatpush1.msra.mxu0 0.0
      %404 = vmatprep.subr.mxu0 0.0
      %405 = vmatpush1.msra.mxu0 0.0
      %406 = vmatprep.subr.mxu0 0.0
      %407 = vmatpush1.msra.mxu0 0.0
      %408 = vmatprep.subr.mxu0 0.0
      %409 = vmatpush1.msra.mxu0 0.0
      %410 = vmatprep.subr.mxu0 0.0
      %411 = vmatpush1.msra.mxu0 0.0
      %412 = vmatprep.subr.mxu0 0.0
      %413 = vmatpush1.msra.mxu0 0.0
      %414 = vmatprep.subr.mxu0 0.0
      %415 = vmatpush1.msra.mxu0 0.0
      %416 = vmatprep.subr.mxu0 0.0
      %417 = vmatpush1.msra.mxu0 0.0
      %418 = vmatprep.mubr.f32.mxu0 0.0
      %419 = vmatmul.mubr.f32.gmra.mrb[0].mxu0 %v348
      %v420 = vpop.f32.mrb[0].mxu0
      %v421 = vadd.f32 0.0, %v420
      %v422 = vpop.f32.mrb[0].mxu0
      %v423 = vadd.f32 0.0, %v422
      %424 = vdwg.mxu0
      %v425 = vadd.f32 %v329, %v421
      %v426 = vadd.f32 %v330, %v423
      %v427 = vld [vmem:[#allocation2] sm:$0xff]
      %v428 = vld [vmem:[#allocation2 + $0x8] sm:$0xf]
      %v429 = vsel %vm216, 1, 0
      %v430 = vsel %vm217, 1, 0
      %vm431 = vcmp.eq.s32.totalorder %v429, 1
      %vm432 = vcmp.eq.s32.totalorder %v430, 1
      %v435 = vcombine.high %v427, %v427
      %436 = vrot.lane.b32.xlu0 %v427, 15
      %v437 = vpop.permute.xlu0 %436
      %438 = vrot.lane.b32.xlu0 %v435, 15
      %v439 = vpop.permute.xlu0 %438
      %440 = vrot.lane.b32.xlu0 %v428, 15
      %v441 = vpop.permute.xlu0 %440
      %vm442 = vcmask 121856
      %v443 = vsel %vm442, %v437, %v439
      %v444 = vsel %vm442, %v439, %v441
      %v447 = vsel %vm431, %v443, 0.0
      %v448 = vsel %vm432, %v444, 0.0
      %s449 = scalar_lea.vmem %s1, 16
      %v450 = vld [vmem:[%s449] sm:$0x3f]
      %v452 = vsel %vm247, %v450, 0
      %v455 = vsel %vm251, %v447, 0
      %v458 = vsel %vm251, %v448, 0
      %460 = vmatprep.subr.mxu0 %v458
      %461 = vmatpush1.msra.mxu0 %v455
      %462 = vmatprep.subr.mxu0 0.0
      %463 = vmatpush1.msra.mxu0 0.0
      %464 = vmatprep.subr.mxu0 0.0
      %465 = vmatpush1.msra.mxu0 0.0
      %466 = vmatprep.subr.mxu0 0.0
      %467 = vmatpush1.msra.mxu0 0.0
      %468 = vmatprep.subr.mxu0 0.0
      %469 = vmatpush1.msra.mxu0 0.0
      %470 = vmatprep.subr.mxu0 0.0
      %471 = vmatpush1.msra.mxu0 0.0
      %472 = vmatprep.subr.mxu0 0.0
      %473 = vmatpush1.msra.mxu0 0.0
      %474 = vmatprep.subr.mxu0 0.0
      %475 = vmatpush1.msra.mxu0 0.0
      %476 = vmatprep.subr.mxu0 0.0
      %477 = vmatpush1.msra.mxu0 0.0
      %478 = vmatprep.subr.mxu0 0.0
      %479 = vmatpush1.msra.mxu0 0.0
      %480 = vmatprep.subr.mxu0 0.0
      %481 = vmatpush1.msra.mxu0 0.0
      %482 = vmatprep.subr.mxu0 0.0
      %483 = vmatpush1.msra.mxu0 0.0
      %484 = vmatprep.subr.mxu0 0.0
      %485 = vmatpush1.msra.mxu0 0.0
      %486 = vmatprep.subr.mxu0 0.0
      %487 = vmatpush1.msra.mxu0 0.0
      %488 = vmatprep.subr.mxu0 0.0
      %489 = vmatpush1.msra.mxu0 0.0
      %490 = vmatprep.subr.mxu0 0.0
      %491 = vmatpush1.msra.mxu0 0.0
      %492 = vmatprep.subr.mxu0 0.0
      %493 = vmatpush1.msra.mxu0 0.0
      %494 = vmatprep.subr.mxu0 0.0
      %495 = vmatpush1.msra.mxu0 0.0
      %496 = vmatprep.subr.mxu0 0.0
      %497 = vmatpush1.msra.mxu0 0.0
      %498 = vmatprep.subr.mxu0 0.0
      %499 = vmatpush1.msra.mxu0 0.0
      %500 = vmatprep.subr.mxu0 0.0
      %501 = vmatpush1.msra.mxu0 0.0
      %502 = vmatprep.subr.mxu0 0.0
      %503 = vmatpush1.msra.mxu0 0.0
      %504 = vmatprep.subr.mxu0 0.0
      %505 = vmatpush1.msra.mxu0 0.0
      %506 = vmatprep.subr.mxu0 0.0
      %507 = vmatpush1.msra.mxu0 0.0
      %508 = vmatprep.subr.mxu0 0.0
      %509 = vmatpush1.msra.mxu0 0.0
      %510 = vmatprep.subr.mxu0 0.0
      %511 = vmatpush1.msra.mxu0 0.0
      %512 = vmatprep.subr.mxu0 0.0
      %513 = vmatpush1.msra.mxu0 0.0
      %514 = vmatprep.subr.mxu0 0.0
      %515 = vmatpush1.msra.mxu0 0.0
      %516 = vmatprep.subr.mxu0 0.0
      %517 = vmatpush1.msra.mxu0 0.0
      %518 = vmatprep.subr.mxu0 0.0
      %519 = vmatpush1.msra.mxu0 0.0
      %520 = vmatprep.subr.mxu0 0.0
      %521 = vmatpush1.msra.mxu0 0.0
      %522 = vmatprep.subr.mxu0 0.0
      %523 = vmatpush1.msra.mxu0 0.0
      %524 = vmatprep.mubr.f32.mxu0 0.0
      %525 = vmatmul.mubr.f32.gmra.mrb[0].mxu0 %v452
      %v526 = vpop.f32.mrb[0].mxu0
      %v527 = vadd.f32 0.0, %v526
      %v528 = vpop.f32.mrb[0].mxu0
      %v529 = vadd.f32 0.0, %v528
      %530 = vdwg.mxu0
      %v531 = vadd.f32 %v425, %v527
      %v532 = vadd.f32 %v426, %v529
      %v533 = vld [vmem:[#allocation2] sm:$0xff]
      %v534 = vld [vmem:[#allocation2 + $0x8] sm:$0xf]
      %v537 = vcombine.high %v533, %v533
      %538 = vrot.lane.b32.xlu0 %v533, 1
      %v539 = vpop.permute.xlu0 %538
      %540 = vrot.lane.b32.xlu0 %v537, 1
      %v541 = vpop.permute.xlu0 %540
      %542 = vrot.lane.b32.xlu0 %v534, 1
      %v543 = vpop.permute.xlu0 %542
      %vm544 = vcmask 7168
      %v545 = vsel %vm544, %v539, %v541
      %v546 = vsel %vm544, %v541, %v543
      %v549 = vsel %vm228, %v545, 0.0
      %v550 = vsel %vm229, %v546, 0.0
      %s551 = scalar_lea.vmem %s1, 24
      %v552 = vld [vmem:[%s551] sm:$0x3f]
      %v554 = vsel %vm247, %v552, 0
      %v557 = vsel %vm251, %v549, 0
      %v560 = vsel %vm251, %v550, 0
      %562 = vmatprep.subr.mxu0 %v560
      %563 = vmatpush1.msra.mxu0 %v557
      %564 = vmatprep.subr.mxu0 0.0
      %565 = vmatpush1.msra.mxu0 0.0
      %566 = vmatprep.subr.mxu0 0.0
      %567 = vmatpush1.msra.mxu0 0.0
      %568 = vmatprep.subr.mxu0 0.0
      %569 = vmatpush1.msra.mxu0 0.0
      %570 = vmatprep.subr.mxu0 0.0
      %571 = vmatpush1.msra.mxu0 0.0
      %572 = vmatprep.subr.mxu0 0.0
      %573 = vmatpush1.msra.mxu0 0.0
      %574 = vmatprep.subr.mxu0 0.0
      %575 = vmatpush1.msra.mxu0 0.0
      %576 = vmatprep.subr.mxu0 0.0
      %577 = vmatpush1.msra.mxu0 0.0
      %578 = vmatprep.subr.mxu0 0.0
      %579 = vmatpush1.msra.mxu0 0.0
      %580 = vmatprep.subr.mxu0 0.0
      %581 = vmatpush1.msra.mxu0 0.0
      %582 = vmatprep.subr.mxu0 0.0
      %583 = vmatpush1.msra.mxu0 0.0
      %584 = vmatprep.subr.mxu0 0.0
      %585 = vmatpush1.msra.mxu0 0.0
      %586 = vmatprep.subr.mxu0 0.0
      %587 = vmatpush1.msra.mxu0 0.0
      %588 = vmatprep.subr.mxu0 0.0
      %589 = vmatpush1.msra.mxu0 0.0
      %590 = vmatprep.subr.mxu0 0.0
      %591 = vmatpush1.msra.mxu0 0.0
      %592 = vmatprep.subr.mxu0 0.0
      %593 = vmatpush1.msra.mxu0 0.0
      %594 = vmatprep.subr.mxu0 0.0
      %595 = vmatpush1.msra.mxu0 0.0
      %596 = vmatprep.subr.mxu0 0.0
      %597 = vmatpush1.msra.mxu0 0.0
      %598 = vmatprep.subr.mxu0 0.0
      %599 = vmatpush1.msra.mxu0 0.0
      %600 = vmatprep.subr.mxu0 0.0
      %601 = vmatpush1.msra.mxu0 0.0
      %602 = vmatprep.subr.mxu0 0.0
      %603 = vmatpush1.msra.mxu0 0.0
      %604 = vmatprep.subr.mxu0 0.0
      %605 = vmatpush1.msra.mxu0 0.0
      %606 = vmatprep.subr.mxu0 0.0
      %607 = vmatpush1.msra.mxu0 0.0
      %608 = vmatprep.subr.mxu0 0.0
      %609 = vmatpush1.msra.mxu0 0.0
      %610 = vmatprep.subr.mxu0 0.0
      %611 = vmatpush1.msra.mxu0 0.0
      %612 = vmatprep.subr.mxu0 0.0
      %613 = vmatpush1.msra.mxu0 0.0
      %614 = vmatprep.subr.mxu0 0.0
      %615 = vmatpush1.msra.mxu0 0.0
      %616 = vmatprep.subr.mxu0 0.0
      %617 = vmatpush1.msra.mxu0 0.0
      %618 = vmatprep.subr.mxu0 0.0
      %619 = vmatpush1.msra.mxu0 0.0
      %620 = vmatprep.subr.mxu0 0.0
      %621 = vmatpush1.msra.mxu0 0.0
      %622 = vmatprep.subr.mxu0 0.0
      %623 = vmatpush1.msra.mxu0 0.0
      %624 = vmatprep.subr.mxu0 0.0
      %625 = vmatpush1.msra.mxu0 0.0
      %626 = vmatprep.mubr.f32.mxu0 0.0
      %627 = vmatmul.mubr.f32.gmra.mrb[0].mxu0 %v554
      %v628 = vpop.f32.mrb[0].mxu0
      %v629 = vadd.f32 0.0, %v628
      %v630 = vpop.f32.mrb[0].mxu0
      %v631 = vadd.f32 0.0, %v630
      %632 = vdwg.mxu0
      %v633 = vadd.f32 %v531, %v629
      %v634 = vadd.f32 %v532, %v631
      %v635 = vld [vmem:[#allocation2 + $0x4] sm:$0xff]
      %s636 = scalar_lea.vmem %s1, 32
      %v637 = vld [vmem:[%s636] sm:$0x3f]
      %v639 = vcombine.high %v635, %v635
      %v641 = vsel %vm247, %v637, 0
      %v643 = vsel %vm251, %v635, 0
      %v645 = vsel %vm251, %v639, 0
      %647 = vmatprep.subr.mxu0 %v645
      %648 = vmatpush1.msra.mxu0 %v643
      %649 = vmatprep.subr.mxu0 0.0
      %650 = vmatpush1.msra.mxu0 0.0
      %651 = vmatprep.subr.mxu0 0.0
      %652 = vmatpush1.msra.mxu0 0.0
      %653 = vmatprep.subr.mxu0 0.0
      %654 = vmatpush1.msra.mxu0 0.0
      %655 = vmatprep.subr.mxu0 0.0
      %656 = vmatpush1.msra.mxu0 0.0
      %657 = vmatprep.subr.mxu0 0.0
      %658 = vmatpush1.msra.mxu0 0.0
      %659 = vmatprep.subr.mxu0 0.0
      %660 = vmatpush1.msra.mxu0 0.0
      %661 = vmatprep.subr.mxu0 0.0
      %662 = vmatpush1.msra.mxu0 0.0
      %663 = vmatprep.subr.mxu0 0.0
      %664 = vmatpush1.msra.mxu0 0.0
      %665 = vmatprep.subr.mxu0 0.0
      %666 = vmatpush1.msra.mxu0 0.0
      %667 = vmatprep.subr.mxu0 0.0
      %668 = vmatpush1.msra.mxu0 0.0
      %669 = vmatprep.subr.mxu0 0.0
      %670 = vmatpush1.msra.mxu0 0.0
      %671 = vmatprep.subr.mxu0 0.0
      %672 = vmatpush1.msra.mxu0 0.0
      %673 = vmatprep.subr.mxu0 0.0
      %674 = vmatpush1.msra.mxu0 0.0
      %675 = vmatprep.subr.mxu0 0.0
      %676 = vmatpush1.msra.mxu0 0.0
      %677 = vmatprep.subr.mxu0 0.0
      %678 = vmatpush1.msra.mxu0 0.0
      %679 = vmatprep.subr.mxu0 0.0
      %680 = vmatpush1.msra.mxu0 0.0
      %681 = vmatprep.subr.mxu0 0.0
      %682 = vmatpush1.msra.mxu0 0.0
      %683 = vmatprep.subr.mxu0 0.0
      %684 = vmatpush1.msra.mxu0 0.0
      %685 = vmatprep.subr.mxu0 0.0
      %686 = vmatpush1.msra.mxu0 0.0
      %687 = vmatprep.subr.mxu0 0.0
      %688 = vmatpush1.msra.mxu0 0.0
      %689 = vmatprep.subr.mxu0 0.0
      %690 = vmatpush1.msra.mxu0 0.0
      %691 = vmatprep.subr.mxu0 0.0
      %692 = vmatpush1.msra.mxu0 0.0
      %693 = vmatprep.subr.mxu0 0.0
      %694 = vmatpush1.msra.mxu0 0.0
      %695 = vmatprep.subr.mxu0 0.0
      %696 = vmatpush1.msra.mxu0 0.0
      %697 = vmatprep.subr.mxu0 0.0
      %698 = vmatpush1.msra.mxu0 0.0
      %699 = vmatprep.subr.mxu0 0.0
      %700 = vmatpush1.msra.mxu0 0.0
      %701 = vmatprep.subr.mxu0 0.0
      %702 = vmatpush1.msra.mxu0 0.0
      %703 = vmatprep.subr.mxu0 0.0
      %704 = vmatpush1.msra.mxu0 0.0
      %705 = vmatprep.subr.mxu0 0.0
      %706 = vmatpush1.msra.mxu0 0.0
      %707 = vmatprep.subr.mxu0 0.0
      %708 = vmatpush1.msra.mxu0 0.0
      %709 = vmatprep.subr.mxu0 0.0
      %710 = vmatpush1.msra.mxu0 0.0
      %711 = vmatprep.mubr.f32.mxu0 0.0
      %712 = vmatmul.mubr.f32.gmra.mrb[0].mxu0 %v641
      %v713 = vpop.f32.mrb[0].mxu0
      %v714 = vadd.f32 0.0, %v713
      %v715 = vpop.f32.mrb[0].mxu0
      %v716 = vadd.f32 0.0, %v715
      %717 = vdwg.mxu0
      %v718 = vadd.f32 %v633, %v714
      %v719 = vadd.f32 %v634, %v716
      %v720 = vld [vmem:[#allocation2 + $0x4] sm:$0xff]
      %v721 = vld [vmem:[#allocation2 + $0xc] sm:$0xf]
      %v724 = vcombine.high %v720, %v720
      %725 = vrot.lane.b32.xlu0 %v720, 127
      %v726 = vpop.permute.xlu0 %725
      %727 = vrot.lane.b32.xlu0 %v724, 127
      %v728 = vpop.permute.xlu0 %727
      %729 = vrot.lane.b32.xlu0 %v721, 127
      %v730 = vpop.permute.xlu0 %729
      %vm731 = vcmask 1039360
      %v732 = vsel %vm731, %v726, %v728
      %v733 = vsel %vm731, %v728, %v730
      %v736 = vsel %vm431, %v732, 0.0
      %v737 = vsel %vm432, %v733, 0.0
      %s738 = scalar_lea.vmem %s1, 40
      %v739 = vld [vmem:[%s738] sm:$0x3f]
      %v741 = vsel %vm247, %v739, 0
      %v744 = vsel %vm251, %v736, 0
      %v747 = vsel %vm251, %v737, 0
      %749 = vmatprep.subr.mxu0 %v747
      %750 = vmatpush1.msra.mxu0 %v744
      %751 = vmatprep.subr.mxu0 0.0
      %752 = vmatpush1.msra.mxu0 0.0
      %753 = vmatprep.subr.mxu0 0.0
      %754 = vmatpush1.msra.mxu0 0.0
      %755 = vmatprep.subr.mxu0 0.0
      %756 = vmatpush1.msra.mxu0 0.0
      %757 = vmatprep.subr.mxu0 0.0
      %758 = vmatpush1.msra.mxu0 0.0
      %759 = vmatprep.subr.mxu0 0.0
      %760 = vmatpush1.msra.mxu0 0.0
      %761 = vmatprep.subr.mxu0 0.0
      %762 = vmatpush1.msra.mxu0 0.0
      %763 = vmatprep.subr.mxu0 0.0
      %764 = vmatpush1.msra.mxu0 0.0
      %765 = vmatprep.subr.mxu0 0.0
      %766 = vmatpush1.msra.mxu0 0.0
      %767 = vmatprep.subr.mxu0 0.0
      %768 = vmatpush1.msra.mxu0 0.0
      %769 = vmatprep.subr.mxu0 0.0
      %770 = vmatpush1.msra.mxu0 0.0
      %771 = vmatprep.subr.mxu0 0.0
      %772 = vmatpush1.msra.mxu0 0.0
      %773 = vmatprep.subr.mxu0 0.0
      %774 = vmatpush1.msra.mxu0 0.0
      %775 = vmatprep.subr.mxu0 0.0
      %776 = vmatpush1.msra.mxu0 0.0
      %777 = vmatprep.subr.mxu0 0.0
      %778 = vmatpush1.msra.mxu0 0.0
      %779 = vmatprep.subr.mxu0 0.0
      %780 = vmatpush1.msra.mxu0 0.0
      %781 = vmatprep.subr.mxu0 0.0
      %782 = vmatpush1.msra.mxu0 0.0
      %783 = vmatprep.subr.mxu0 0.0
      %784 = vmatpush1.msra.mxu0 0.0
      %785 = vmatprep.subr.mxu0 0.0
      %786 = vmatpush1.msra.mxu0 0.0
      %787 = vmatprep.subr.mxu0 0.0
      %788 = vmatpush1.msra.mxu0 0.0
      %789 = vmatprep.subr.mxu0 0.0
      %790 = vmatpush1.msra.mxu0 0.0
      %791 = vmatprep.subr.mxu0 0.0
      %792 = vmatpush1.msra.mxu0 0.0
      %793 = vmatprep.subr.mxu0 0.0
      %794 = vmatpush1.msra.mxu0 0.0
      %795 = vmatprep.subr.mxu0 0.0
      %796 = vmatpush1.msra.mxu0 0.0
      %797 = vmatprep.subr.mxu0 0.0
      %798 = vmatpush1.msra.mxu0 0.0
      %799 = vmatprep.subr.mxu0 0.0
      %800 = vmatpush1.msra.mxu0 0.0
      %801 = vmatprep.subr.mxu0 0.0
      %802 = vmatpush1.msra.mxu0 0.0
      %803 = vmatprep.subr.mxu0 0.0
      %804 = vmatpush1.msra.mxu0 0.0
      %805 = vmatprep.subr.mxu0 0.0
      %806 = vmatpush1.msra.mxu0 0.0
      %807 = vmatprep.subr.mxu0 0.0
      %808 = vmatpush1.msra.mxu0 0.0
      %809 = vmatprep.subr.mxu0 0.0
      %810 = vmatpush1.msra.mxu0 0.0
      %811 = vmatprep.subr.mxu0 0.0
      %812 = vmatpush1.msra.mxu0 0.0
      %813 = vmatprep.mubr.f32.mxu0 0.0
      %814 = vmatmul.mubr.f32.gmra.mrb[0].mxu0 %v741
      %v815 = vpop.f32.mrb[0].mxu0
      %v816 = vadd.f32 0.0, %v815
      %v817 = vpop.f32.mrb[0].mxu0
      %v818 = vadd.f32 0.0, %v817
      %819 = vdwg.mxu0
      %v820 = vadd.f32 %v718, %v816
      %v821 = vadd.f32 %v719, %v818
      %v822 = vld [vmem:[#allocation2 + $0x4] sm:$0xff]
      %v823 = vld [vmem:[#allocation2 + $0xc] sm:$0xf]
      %v826 = vcombine.high %v822, %v822
      %827 = vrot.lane.b32.xlu0 %v822, 113
      %v828 = vpop.permute.xlu0 %827
      %829 = vrot.lane.b32.xlu0 %v826, 113
      %v830 = vpop.permute.xlu0 %829
      %831 = vrot.lane.b32.xlu0 %v823, 113
      %v832 = vpop.permute.xlu0 %831
      %vm833 = vcmask 924672
      %v834 = vsel %vm833, %v828, %v830
      %v835 = vsel %vm833, %v830, %v832
      %v838 = vsel %vm228, %v834, 0.0
      %v839 = vsel %vm229, %v835, 0.0
      %s840 = scalar_lea.vmem %s1, 48
      %v841 = vld [vmem:[%s840] sm:$0x3f]
      %v843 = vsel %vm247, %v841, 0
      %v846 = vsel %vm251, %v838, 0
      %v849 = vsel %vm251, %v839, 0
      %851 = vmatprep.subr.mxu0 %v849
      %852 = vmatpush1.msra.mxu0 %v846
      %853 = vmatprep.subr.mxu0 0.0
      %854 = vmatpush1.msra.mxu0 0.0
      %855 = vmatprep.subr.mxu0 0.0
      %856 = vmatpush1.msra.mxu0 0.0
      %857 = vmatprep.subr.mxu0 0.0
      %858 = vmatpush1.msra.mxu0 0.0
      %859 = vmatprep.subr.mxu0 0.0
      %860 = vmatpush1.msra.mxu0 0.0
      %861 = vmatprep.subr.mxu0 0.0
      %862 = vmatpush1.msra.mxu0 0.0
      %863 = vmatprep.subr.mxu0 0.0
      %864 = vmatpush1.msra.mxu0 0.0
      %865 = vmatprep.subr.mxu0 0.0
      %866 = vmatpush1.msra.mxu0 0.0
      %867 = vmatprep.subr.mxu0 0.0
      %868 = vmatpush1.msra.mxu0 0.0
      %869 = vmatprep.subr.mxu0 0.0
      %870 = vmatpush1.msra.mxu0 0.0
      %871 = vmatprep.subr.mxu0 0.0
      %872 = vmatpush1.msra.mxu0 0.0
      %873 = vmatprep.subr.mxu0 0.0
      %874 = vmatpush1.msra.mxu0 0.0
      %875 = vmatprep.subr.mxu0 0.0
      %876 = vmatpush1.msra.mxu0 0.0
      %877 = vmatprep.subr.mxu0 0.0
      %878 = vmatpush1.msra.mxu0 0.0
      %879 = vmatprep.subr.mxu0 0.0
      %880 = vmatpush1.msra.mxu0 0.0
      %881 = vmatprep.subr.mxu0 0.0
      %882 = vmatpush1.msra.mxu0 0.0
      %883 = vmatprep.subr.mxu0 0.0
      %884 = vmatpush1.msra.mxu0 0.0
      %885 = vmatprep.subr.mxu0 0.0
      %886 = vmatpush1.msra.mxu0 0.0
      %887 = vmatprep.subr.mxu0 0.0
      %888 = vmatpush1.msra.mxu0 0.0
      %889 = vmatprep.subr.mxu0 0.0
      %890 = vmatpush1.msra.mxu0 0.0
      %891 = vmatprep.subr.mxu0 0.0
      %892 = vmatpush1.msra.mxu0 0.0
      %893 = vmatprep.subr.mxu0 0.0
      %894 = vmatpush1.msra.mxu0 0.0
      %895 = vmatprep.subr.mxu0 0.0
      %896 = vmatpush1.msra.mxu0 0.0
      %897 = vmatprep.subr.mxu0 0.0
      %898 = vmatpush1.msra.mxu0 0.0
      %899 = vmatprep.subr.mxu0 0.0
      %900 = vmatpush1.msra.mxu0 0.0
      %901 = vmatprep.subr.mxu0 0.0
      %902 = vmatpush1.msra.mxu0 0.0
      %903 = vmatprep.subr.mxu0 0.0
      %904 = vmatpush1.msra.mxu0 0.0
      %905 = vmatprep.subr.mxu0 0.0
      %906 = vmatpush1.msra.mxu0 0.0
      %907 = vmatprep.subr.mxu0 0.0
      %908 = vmatpush1.msra.mxu0 0.0
      %909 = vmatprep.subr.mxu0 0.0
      %910 = vmatpush1.msra.mxu0 0.0
      %911 = vmatprep.subr.mxu0 0.0
      %912 = vmatpush1.msra.mxu0 0.0
      %913 = vmatprep.subr.mxu0 0.0
      %914 = vmatpush1.msra.mxu0 0.0
      %915 = vmatprep.mubr.f32.mxu0 0.0
      %916 = vmatmul.mubr.f32.gmra.mrb[0].mxu0 %v843
      %v917 = vpop.f32.mrb[0].mxu0
      %v918 = vadd.f32 0.0, %v917
      %v919 = vpop.f32.mrb[0].mxu0
      %v920 = vadd.f32 0.0, %v919
      %921 = vdwg.mxu0
      %v922 = vadd.f32 %v820, %v918
      %v923 = vadd.f32 %v821, %v920
      %v924 = vld [vmem:[#allocation2 + $0x4] sm:$0xff]
      %v925 = vld [vmem:[#allocation2 + $0xc] sm:$0xf]
      %s926 = scalar_lea.vmem %s1, 56
      %v927 = vld [vmem:[%s926] sm:$0x3f]
      %v930 = vcombine.high %v924, %v924
      %931 = vrot.lane.b32.xlu0 %v924, 112
      %v932 = vpop.permute.xlu0 %931
      %933 = vrot.lane.b32.xlu0 %v930, 112
      %v934 = vpop.permute.xlu0 %933
      %935 = vrot.lane.b32.xlu0 %v925, 112
      %v936 = vpop.permute.xlu0 %935
      %vm937 = vcmask 916480
      %v938 = vsel %vm937, %v932, %v934
      %v939 = vsel %vm937, %v934, %v936
      %v941 = vsel %vm247, %v927, 0
      %v943 = vsel %vm251, %v938, 0
      %v945 = vsel %vm251, %v939, 0
      %947 = vmatprep.subr.mxu0 %v945
      %948 = vmatpush1.msra.mxu0 %v943
      %949 = vmatprep.subr.mxu0 0.0
      %950 = vmatpush1.msra.mxu0 0.0
      %951 = vmatprep.subr.mxu0 0.0
      %952 = vmatpush1.msra.mxu0 0.0
      %953 = vmatprep.subr.mxu0 0.0
      %954 = vmatpush1.msra.mxu0 0.0
      %955 = vmatprep.subr.mxu0 0.0
      %956 = vmatpush1.msra.mxu0 0.0
      %957 = vmatprep.subr.mxu0 0.0
      %958 = vmatpush1.msra.mxu0 0.0
      %959 = vmatprep.subr.mxu0 0.0
      %960 = vmatpush1.msra.mxu0 0.0
      %961 = vmatprep.subr.mxu0 0.0
      %962 = vmatpush1.msra.mxu0 0.0
      %963 = vmatprep.subr.mxu0 0.0
      %964 = vmatpush1.msra.mxu0 0.0
      %965 = vmatprep.subr.mxu0 0.0
      %966 = vmatpush1.msra.mxu0 0.0
      %967 = vmatprep.subr.mxu0 0.0
      %968 = vmatpush1.msra.mxu0 0.0
      %969 = vmatprep.subr.mxu0 0.0
      %970 = vmatpush1.msra.mxu0 0.0
      %971 = vmatprep.subr.mxu0 0.0
      %972 = vmatpush1.msra.mxu0 0.0
      %973 = vmatprep.subr.mxu0 0.0
      %974 = vmatpush1.msra.mxu0 0.0
      %975 = vmatprep.subr.mxu0 0.0
      %976 = vmatpush1.msra.mxu0 0.0
      %977 = vmatprep.subr.mxu0 0.0
      %978 = vmatpush1.msra.mxu0 0.0
      %979 = vmatprep.subr.mxu0 0.0
      %980 = vmatpush1.msra.mxu0 0.0
      %981 = vmatprep.subr.mxu0 0.0
      %982 = vmatpush1.msra.mxu0 0.0
      %983 = vmatprep.subr.mxu0 0.0
      %984 = vmatpush1.msra.mxu0 0.0
      %985 = vmatprep.subr.mxu0 0.0
      %986 = vmatpush1.msra.mxu0 0.0
      %987 = vmatprep.subr.mxu0 0.0
      %988 = vmatpush1.msra.mxu0 0.0
      %989 = vmatprep.subr.mxu0 0.0
      %990 = vmatpush1.msra.mxu0 0.0
      %991 = vmatprep.subr.mxu0 0.0
      %992 = vmatpush1.msra.mxu0 0.0
      %993 = vmatprep.subr.mxu0 0.0
      %994 = vmatpush1.msra.mxu0 0.0
      %995 = vmatprep.subr.mxu0 0.0
      %996 = vmatpush1.msra.mxu0 0.0
      %997 = vmatprep.subr.mxu0 0.0
      %998 = vmatpush1.msra.mxu0 0.0
      %999 = vmatprep.subr.mxu0 0.0
      %1000 = vmatpush1.msra.mxu0 0.0
      %1001 = vmatprep.subr.mxu0 0.0
      %1002 = vmatpush1.msra.mxu0 0.0
      %1003 = vmatprep.subr.mxu0 0.0
      %1004 = vmatpush1.msra.mxu0 0.0
      %1005 = vmatprep.subr.mxu0 0.0
      %1006 = vmatpush1.msra.mxu0 0.0
      %1007 = vmatprep.subr.mxu0 0.0
      %1008 = vmatpush1.msra.mxu0 0.0
      %1009 = vmatprep.subr.mxu0 0.0
      %1010 = vmatpush1.msra.mxu0 0.0
      %1011 = vmatprep.mubr.f32.mxu0 0.0
      %1012 = vmatmul.mubr.f32.gmra.mrb[0].mxu0 %v941
      %v1013 = vpop.f32.mrb[0].mxu0
      %v1014 = vadd.f32 0.0, %v1013
      %v1015 = vpop.f32.mrb[0].mxu0
      %v1016 = vadd.f32 0.0, %v1015
      %1017 = vdwg.mxu0
      %v1018 = vadd.f32 %v922, %v1014
      %v1019 = vadd.f32 %v923, %v1016
      %v1020 = vld [vmem:[#allocation2 + $0x4] sm:$0xff]
      %v1021 = vld [vmem:[#allocation2 + $0xc] sm:$0xf]
      %v1024 = vcombine.high %v1020, %v1020
      %1025 = vrot.lane.b32.xlu0 %v1020, 111
      %v1026 = vpop.permute.xlu0 %1025
      %1027 = vrot.lane.b32.xlu0 %v1024, 111
      %v1028 = vpop.permute.xlu0 %1027
      %1029 = vrot.lane.b32.xlu0 %v1021, 111
      %v1030 = vpop.permute.xlu0 %1029
      %vm1031 = vcmask 908288
      %v1032 = vsel %vm1031, %v1026, %v1028
      %v1033 = vsel %vm1031, %v1028, %v1030
      %v1036 = vsel %vm431, %v1032, 0.0
      %v1037 = vsel %vm432, %v1033, 0.0
      %s1038 = scalar_lea.vmem %s1, 64
      %v1039 = vld [vmem:[%s1038] sm:$0x3f]
      %v1041 = vsel %vm247, %v1039, 0
      %v1044 = vsel %vm251, %v1036, 0
      %v1047 = vsel %vm251, %v1037, 0
      %1049 = vmatprep.subr.mxu0 %v1047
      %1050 = vmatpush1.msra.mxu0 %v1044
      %1051 = vmatprep.subr.mxu0 0.0
      %1052 = vmatpush1.msra.mxu0 0.0
      %1053 = vmatprep.subr.mxu0 0.0
      %1054 = vmatpush1.msra.mxu0 0.0
      %1055 = vmatprep.subr.mxu0 0.0
      %1056 = vmatpush1.msra.mxu0 0.0
      %1057 = vmatprep.subr.mxu0 0.0
      %1058 = vmatpush1.msra.mxu0 0.0
      %1059 = vmatprep.subr.mxu0 0.0
      %1060 = vmatpush1.msra.mxu0 0.0
      %1061 = vmatprep.subr.mxu0 0.0
      %1062 = vmatpush1.msra.mxu0 0.0
      %1063 = vmatprep.subr.mxu0 0.0
      %1064 = vmatpush1.msra.mxu0 0.0
      %1065 = vmatprep.subr.mxu0 0.0
      %1066 = vmatpush1.msra.mxu0 0.0
      %1067 = vmatprep.subr.mxu0 0.0
      %1068 = vmatpush1.msra.mxu0 0.0
      %1069 = vmatprep.subr.mxu0 0.0
      %1070 = vmatpush1.msra.mxu0 0.0
      %1071 = vmatprep.subr.mxu0 0.0
      %1072 = vmatpush1.msra.mxu0 0.0
      %1073 = vmatprep.subr.mxu0 0.0
      %1074 = vmatpush1.msra.mxu0 0.0
      %1075 = vmatprep.subr.mxu0 0.0
      %1076 = vmatpush1.msra.mxu0 0.0
      %1077 = vmatprep.subr.mxu0 0.0
      %1078 = vmatpush1.msra.mxu0 0.0
      %1079 = vmatprep.subr.mxu0 0.0
      %1080 = vmatpush1.msra.mxu0 0.0
      %1081 = vmatprep.subr.mxu0 0.0
      %1082 = vmatpush1.msra.mxu0 0.0
      %1083 = vmatprep.subr.mxu0 0.0
      %1084 = vmatpush1.msra.mxu0 0.0
      %1085 = vmatprep.subr.mxu0 0.0
      %1086 = vmatpush1.msra.mxu0 0.0
      %1087 = vmatprep.subr.mxu0 0.0
      %1088 = vmatpush1.msra.mxu0 0.0
      %1089 = vmatprep.subr.mxu0 0.0
      %1090 = vmatpush1.msra.mxu0 0.0
      %1091 = vmatprep.subr.mxu0 0.0
      %1092 = vmatpush1.msra.mxu0 0.0
      %1093 = vmatprep.subr.mxu0 0.0
      %1094 = vmatpush1.msra.mxu0 0.0
      %1095 = vmatprep.subr.mxu0 0.0
      %1096 = vmatpush1.msra.mxu0 0.0
      %1097 = vmatprep.subr.mxu0 0.0
      %1098 = vmatpush1.msra.mxu0 0.0
      %1099 = vmatprep.subr.mxu0 0.0
      %1100 = vmatpush1.msra.mxu0 0.0
      %1101 = vmatprep.subr.mxu0 0.0
      %1102 = vmatpush1.msra.mxu0 0.0
      %1103 = vmatprep.subr.mxu0 0.0
      %1104 = vmatpush1.msra.mxu0 0.0
      %1105 = vmatprep.subr.mxu0 0.0
      %1106 = vmatpush1.msra.mxu0 0.0
      %1107 = vmatprep.subr.mxu0 0.0
      %1108 = vmatpush1.msra.mxu0 0.0
      %1109 = vmatprep.subr.mxu0 0.0
      %1110 = vmatpush1.msra.mxu0 0.0
      %1111 = vmatprep.subr.mxu0 0.0
      %1112 = vmatpush1.msra.mxu0 0.0
      %1113 = vmatprep.mubr.f32.mxu0 0.0
      %1114 = vmatmul.mubr.f32.gmra.mrb[0].mxu0 %v1041
      %v1115 = vpop.f32.mrb[0].mxu0
      %v1116 = vadd.f32 0.0, %v1115
      %v1117 = vpop.f32.mrb[0].mxu0
      %v1118 = vadd.f32 0.0, %v1117
      %1119 = vdwg.mxu0
      %v1120 = vadd.f32 %v1018, %v1116
      %v1121 = vadd.f32 %v1019, %v1118
      %v1122 = vmax.f32 %v1120, 0.0
      %v1123 = vmax.f32 %v1121, 0.0
      %1124 = vst [vmem:[%s170] sm:$0x3f] %v1122
      %1125 = vst [vmem:[%s170 + $0x8] sm:$0x3f] %v1123
      %p1126 = scmp.lt.s32.totalorder %s14, 1
      %s1127 = scalar_select %p1126, %s14, 1
      %s1128 = smul.addr %s1127, 2
      %s1129 = smul.addr %s1128, 8
      %s1130 = scalar_lea.vmem %s3, %s1129
      // Predicated region
      $region33: #{tpu_custom_call.1} parent=31 // pred_check
        %p1131 = pneg %p100
      $region34: #{tpu_custom_call.1} parent=31 // pred_check_branch
        %1133 = sbr.rel (%p1131) target = $region36
      $region35: #{tpu_custom_call.1} parent=31 // pred_region
        _
      $region36: #{tpu_custom_call.1} parent=31 // pred_fallthru
        _
    $region32: #{tpu_custom_call.1} parent=5 // pred_fallthru
      _
    %p1134 = scmp.le.s32.totalorder 2, %s9
    // Predicated region
    $region37: #{tpu_custom_call.1} parent=5 // pred_check
      %p1135 = pneg %p1134
    $region38: #{tpu_custom_call.1} parent=5 // pred_check_branch
      %1137 = sbr.rel (%p1135) target = $region40
    $region39: #{tpu_custom_call.1} parent=5 // pred_region
      %s1138 = ssub.s32 %s9, 2
      // Predicated region
      $region41: #{tpu_custom_call.1} parent=39 // pred_check
        %p1139 = pneg %p106
      $region42: #{tpu_custom_call.1} parent=39 // pred_check_branch
        %1141 = sbr.rel (%p1139) target = $region44
      $region43: #{tpu_custom_call.1} parent=39 // pred_region
        %p1142 = scmp.lt.s32.totalorder %s15, 1
        %s1143 = scalar_select %p1142, %s15, 1
        %s1144 = smul.addr %s1143, 2
        %s1145 = smul.addr %s1144, 8
        %s1146 = scalar_lea.vmem %s3, %s1145
      $region44: #{tpu_custom_call.1} parent=39 // pred_fallthru
        _
    $region40: #{tpu_custom_call.1} parent=5 // pred_fallthru
      _
  $region6: #{tpu_custom_call.1} parent=0 // loop_footer
    %s13 = sadd.s32 1, %s9
  $region7: #{tpu_custom_call.1} parent=0 // loop_footer_branch
    %8 = sbr.rel target = $region3
  $region8: #{tpu_custom_call.1} parent=0 // loop_exit
    _

</llo_original>
